<compile_context>
chip_gen: v7x
topology: tpu7x:2x2x1
jax: 0.10.0
libtpu: 0.0.40
codegen_flags: <defaults>
</compile_context>

<pallas_src>
import jax
import jax.numpy as jnp
from jax.experimental import pallas as pl
from jax.experimental.pallas import tpu as pltpu


# ----------------------------- Pallas kernel --------------------------------

def _scale_rows_kernel(s_ref, x_ref, o_ref):
    """Bare broadcast-multiply: (TM, D) * (TM, 1) -> (TM, D), in x's dtype."""
    o_ref[...] = x_ref[...] * s_ref[...]


def _round_up(v, m):
    return ((v + m - 1) // m) * m


def _apply_row_scale(x2d, scale2d):
    """x2d: (R, D), scale2d: (R, 1) in x2d.dtype. Returns x2d * scale2d."""
    R, D = x2d.shape
    bytes_per_row = D * jnp.dtype(x2d.dtype).itemsize

    # Row tile: target ~2 MiB per x tile (hits the HBM roofline per the TPU
    # tiling measurements) while keeping double-buffered in + out tiles well
    # under the scoped VMEM limit on every generation.
    # TODO(synk): extremely wide rows (D*itemsize >> 2 MiB) would also need a
    # lane-axis grid; not needed for ViT widths.
    target_tile_bytes = 2 * 1024 * 1024
    vmem_budget = 16 * 1024 * 1024  # headroom inside the 32 MiB limit
    tm = max(8, min(target_tile_bytes // bytes_per_row,
                    vmem_budget // (4 * bytes_per_row)) // 8 * 8)
    tm = min(tm, 1024, _round_up(R, 8))

    out = pl.pallas_call(
        _scale_rows_kernel,
        out_shape=jax.ShapeDtypeStruct((R, D), x2d.dtype),
        grid_spec=pltpu.PrefetchScalarGridSpec(
            num_scalar_prefetch=0,
            grid=(pl.cdiv(R, tm),),            # ragged last tile handled by Pallas
            in_specs=[
                pl.BlockSpec((tm, 1), lambda r: (r, 0)),   # per-row scale
                pl.BlockSpec((tm, D), lambda r: (r, 0)),   # row tile of x
            ],
            out_specs=pl.BlockSpec((tm, D), lambda r: (r, 0)),
        ),
        compiler_params=pltpu.CompilerParams(
            dimension_semantics=("parallel",),
            vmem_limit_bytes=32 * 1024 * 1024,
        ),
    )(scale2d, x2d)
    return out


# ------------------------------ public wrapper -------------------------------

def drop_patch(x, drop_patch_mask=None, *, drop_prob=0.0, scale_by_keep=True, key=None):
    """JAX/Pallas equivalent of DropPatch.forward for x of shape [B, N, D].

    Token 0 is the CLS token; drop_patch_mask is (B, N-1) with 1 = drop patch.
    """
    # TODO(synk): list-of-tensors input (torch.stack branch) not supported; pass a stacked 3D x.
    B, N, D = x.shape

    if drop_patch_mask is not None:
        mask_f = drop_patch_mask.astype(jnp.float32)                      # (B, N-1)
        # keep_prob per sample; matches torch (inf/NaN if every patch dropped).
        keep_prob = jnp.sum((mask_f == 0.0).astype(jnp.float32),
                            axis=-1, keepdims=True) / jnp.float32(N - 1)  # (B, 1)
        drop_tensor = (1.0 - mask_f) / keep_prob                          # (B, N-1)
        # CLS token (slot 0) keeps scale 1.0.
        scale = jnp.concatenate(
            [jnp.ones((B, 1), jnp.float32), drop_tensor], axis=1)         # (B, N)
        scale2d = scale.reshape(B * N, 1).astype(x.dtype)
        out2d = _apply_row_scale(x.reshape(B * N, D), scale2d)
        return out2d.reshape(B, N, D)

    if drop_prob == 0.0:
        return x

    # Stochastic-depth path: per-(sample, token) bernoulli keep mask.
    # TODO(synk): bernoulli RNG uses jax.random in the wrapper (torch RNG stream
    # is not reproducible anyway); the elementwise scale runs in the Pallas kernel.
    keep_prob = 1.0 - drop_prob
    rt = jax.random.bernoulli(key, p=keep_prob, shape=(B, N, 1)).astype(jnp.float32)
    if keep_prob > 0.0 and scale_by_keep:
        rt = rt / keep_prob
    scale2d = rt.reshape(B * N, 1).astype(x.dtype)
    out2d = _apply_row_scale(x.reshape(B * N, D), scale2d)
    return out2d.reshape(B, N, D)


# ---------------- pure-JAX references (for correctness check) ----------------

def _ref_mask_path(x, mask):
    keep_prob = jnp.sum((mask == 0).astype(jnp.float32), axis=-1, keepdims=True) / mask.shape[-1]
    drop_tensor = (1.0 - mask) / keep_prob                                # (B, N-1)
    patches = x[:, 1:, :] * drop_tensor[:, :, None]
    return jnp.concatenate([x[:, :1, :], patches], axis=1)


if __name__ == "__main__":
    key = jax.random.PRNGKey(0)
    kx, km, kr = jax.random.split(key, 3)

    B, N, D = 2, 9, 128  # batch=2, tokens = 1 CLS + 8 patches, hidden=128
    x = jax.random.normal(kx, (B, N, D), dtype=jnp.float32)
    # binary patch mask: 1 = drop patch, 0 = keep patch
    mask = (jax.random.uniform(km, (B, N - 1)) < 0.25).astype(jnp.float32)

    # --- path 1: explicit drop_patch_mask (B*N = 18 rows -> exercises ragged tile) ---
    out = jax.block_until_ready(drop_patch(x, drop_patch_mask=mask))
    ref = _ref_mask_path(x, mask)
    assert out.shape == x.shape and out.dtype == x.dtype
    assert jnp.allclose(out, ref, atol=1e-5, rtol=1e-5), "mask path mismatch"

    # --- path 2: stochastic depth with drop_prob ---
    drop_prob = 0.3
    out2 = jax.block_until_ready(
        drop_patch(x, drop_patch_mask=None, drop_prob=drop_prob, key=kr))
    keep_prob = 1.0 - drop_prob
    rt_ref = jax.random.bernoulli(kr, p=keep_prob, shape=(B, N, 1)).astype(jnp.float32) / keep_prob
    ref2 = x * rt_ref
    assert jnp.allclose(out2, ref2, atol=1e-5, rtol=1e-5), "drop_prob path mismatch"

    # --- path 3: drop_prob == 0 is identity ---
    out_id = drop_patch(x, drop_patch_mask=None, drop_prob=0.0)
    assert out_id is x

    # --- path 4: bf16 input exercises the no-upcast kernel body ---
    xb = x.astype(jnp.bfloat16)
    out4 = jax.block_until_ready(drop_patch(xb, drop_patch_mask=mask))
    assert out4.dtype == jnp.bfloat16 and out4.shape == xb.shape
    ref4 = _ref_mask_path(xb.astype(jnp.float32), mask)
    assert jnp.allclose(out4.astype(jnp.float32), ref4, atol=3e-2, rtol=3e-2)

    print("KERNEL_OK")
</pallas_src>

<mosaic_0001>
module attributes {stable_mosaic.version = 11 : i64} {
  func.func @_scale_rows_kernel(%arg0: i32, %arg1: memref<24x1xf32, #tpu.memory_space<vmem>>, %arg2: memref<24x128xf32, #tpu.memory_space<vmem>>, %arg3: memref<24x128xf32, #tpu.memory_space<vmem>>) attributes {dimension_semantics = [#tpu.dimension_semantics<parallel>], iteration_bounds = array<i64: 1>, scalar_prefetch = 0 : i64, scratch_operands = 0 : i64, tpu.core_type = #tpu.core_type<tc>, window_params = [{transform_indices = @transform_0, window_bounds = array<i64: 24, 1>}, {transform_indices = @transform_1, window_bounds = array<i64: 24, 128>}, {transform_indices = @transform_2, window_bounds = array<i64: 24, 128>}]} {
    %c0 = arith.constant 0 : index
    %c0_0 = arith.constant 0 : index
    %0 = vector.load %arg2[%c0, %c0_0] : memref<24x128xf32, #tpu.memory_space<vmem>>, vector<24x128xf32>
    %c0_1 = arith.constant 0 : index
    %c0_2 = arith.constant 0 : index
    %1 = vector.load %arg1[%c0_1, %c0_2] : memref<24x1xf32, #tpu.memory_space<vmem>>, vector<24x1xf32>
    %2 = vector.broadcast %1 : vector<24x1xf32> to vector<24x128xf32>
    %3 = arith.mulf %0, %2 : vector<24x128xf32>
    %c0_3 = arith.constant 0 : index
    %c0_4 = arith.constant 0 : index
    %4 = vector.load %arg3[%c0_3, %c0_4] : memref<24x128xf32, #tpu.memory_space<vmem>>, vector<24x128xf32>
    tpu.vector_store %arg3[%c0_3, %c0_4], %3 {strides = array<i32>} : memref<24x128xf32, #tpu.memory_space<vmem>>, vector<24x128xf32>,
    return
  }
  func.func @transform_0(%arg0: i32) -> (i32, i32) {
    %c0_i32 = arith.constant 0 : i32
    %c0_i32_0 = arith.constant 0 : i32
    return %arg0, %c0_i32 : i32, i32
  }
  func.func @transform_1(%arg0: i32) -> (i32, i32) {
    %c0_i32 = arith.constant 0 : i32
    %c0_i32_0 = arith.constant 0 : i32
    return %arg0, %c0_i32 : i32, i32
  }
  func.func @transform_2(%arg0: i32) -> (i32, i32) {
    %c0_i32 = arith.constant 0 : i32
    %c0_i32_0 = arith.constant 0 : i32
    return %arg0, %c0_i32 : i32, i32
  }
}

</mosaic_0001>

<llo_original>
// kernel: tpu_custom_call.1
$region0: #{tpu_custom_call.1}
  #allocation0 [shape = 'u32[]', space=smem, size = 0x4, offset = 0x4, fixed_abs, tag = 'smem constant byte address 0x4 - core index']
  #allocation1 [shape = 'u32[144,128]{1,0:T(1,128)}', space=vmem, size = 0x12000, scoped, tag = 'internal scratch']
  %s0 = inlined_call_operand.vmem [shape: f32[18,1], index: 0, kind: input, shape index: {}]
  %s1 = inlined_call_operand.vmem [shape: f32[18,128], index: 1, kind: input, shape index: {}]
  %s2 = inlined_call_operand.hbm [shape: f32[18,128], index: 2, kind: output, shape index: {}]
  %s3 = sld [smem:[#allocation0]]
  $region18: #{tpu_custom_call.1} parent=0
    _
  %s5 = ssub.s32 1, %s3
  %s6 = scalar_select 0, %s5, %s3
  $region1: #{tpu_custom_call.1} parent=0
    #allocation2 [shape = 'u8[12288]{0}', space=vmem, size = 0x3000, scoped, tag = 'output window, operand 0, single buffered']
    #allocation3 [shape = 's32[1]{0}', space=sflag, size = 0x4, scoped, tag = 'scoped memory for tpu_custom_call.1']
    %7 = vsyncpa [#allocation3], 0
    // Predicated region
    $region2: #{tpu_custom_call.1} parent=1 // pred_check
      _
    $region3: #{tpu_custom_call.1} parent=1 // pred_check_branch
      %9 = sbr.rel (0) target = $region5
    $region4: #{tpu_custom_call.1} parent=1 // pred_region
      _
    $region5: #{tpu_custom_call.1} parent=1 // pred_fallthru
      _
    // Predicated region
    $region6: #{tpu_custom_call.1} parent=1 // pred_check
      _
    $region7: #{tpu_custom_call.1} parent=1 // pred_check_branch
      %11 = sbr.rel (0) target = $region9
    $region8: #{tpu_custom_call.1} parent=1 // pred_region
      _
    $region9: #{tpu_custom_call.1} parent=1 // pred_fallthru
      _
    %v12 = vld [vmem:[%s1] sm:$0xff]
    %v13 = vld [vmem:[%s1 + $0x8] sm:$0xff]
    %v14 = vld [vmem:[%s1 + $0x10] sm:$0xff]
    %v15 = vld [vmem:[%s0] sm:$0xff]
    %v16 = vld [vmem:[%s0 + $0x8] sm:$0xff]
    %v17 = vld [vmem:[%s0 + $0x10] sm:$0xff]
    %19 = vset.pattern.permute.xlu0 0
    %20 = vperm.xlu0 %19, %v15
    %v21 = vpop.permute.xlu0 %20
    %24 = vset.pattern.permute.xlu0 0
    %25 = vperm.xlu0 %24, %v16
    %v26 = vpop.permute.xlu0 %25
    %29 = vset.pattern.permute.xlu0 0
    %30 = vperm.xlu0 %29, %v17
    %v31 = vpop.permute.xlu0 %30
    %v33 = vmul.f32 %v12, %v21
    %v34 = vmul.f32 %v13, %v26
    %v35 = vmul.f32 %v14, %v31
    %36 = vst [vmem:[#allocation2] sm:$0xff] %v33
    %37 = vst [vmem:[#allocation2 + $0x8] sm:$0xff] %v34
    %38 = vst [vmem:[#allocation2 + $0x10] sm:$0xff] %v35
    // Predicated region
    $region10: #{tpu_custom_call.1} parent=1 // pred_check
      _
    $region11: #{tpu_custom_call.1} parent=1 // pred_check_branch
      %40 = sbr.rel (0) target = $region13
    $region12: #{tpu_custom_call.1} parent=1 // pred_region
      %s42 = ssub.s32 384, 384
      %43 = vsyncadd [#allocation3], %s42
      %s44 = sshll.u32 [#allocation2], 4
      %s45 = int_to_ptr.vmem [resolvable:$true] %s44
      %50 = dma.vmem_to_hbm [thread:$0]  %s45, 384, %s2, [#allocation3], 128, 128, 8
    $region13: #{tpu_custom_call.1} parent=1 // pred_fallthru
      _
    // Predicated region
    $region14: #{tpu_custom_call.1} parent=1 // pred_check
      _
    $region15: #{tpu_custom_call.1} parent=1 // pred_check_branch
      %52 = sbr.rel (0) target = $region17
    $region16: #{tpu_custom_call.1} parent=1 // pred_region
      %53 = dma.done [#allocation3], 384
    $region17: #{tpu_custom_call.1} parent=1 // pred_fallthru
      _
    %54 = vsyncpa [#allocation3], 1

</llo_original>
